<compile_context>
chip_gen: v5e
topology: v5e:2x2
jax: 0.10.0
libtpu: 0.0.40
codegen_flags: <defaults>
</compile_context>

<pallas_src>
import jax
import jax.numpy as jnp
from jax.experimental import pallas as pl
from jax.experimental.pallas import tpu as pltpu


def linear_kernel(x_ref, w_ref, b_ref, o_ref):
    # Fused linear tile: matmul on the MXU (f32 accumulation) + bias add on
    # the VPU.  w_ref/b_ref are fully resident (tiny: F*C + C floats); only x
    # and the output stream through the pipeline.
    acc = jnp.dot(x_ref[...], w_ref[...], preferred_element_type=jnp.float32)
    o_ref[...] = (acc + b_ref[...]).astype(o_ref.dtype)


def _round_up(x, m):
    return (x + m - 1) // m * m


def office_home_dg_classifier(x, w, b, *, block_b=4096):
    """Forward of OfficeHomeDGClassifier: nn.Linear(feature_dim, num_classes).

    x: (B, feature_dim) float32
    w: (feature_dim, num_classes) float32  (transpose of PyTorch's (C, F) weight)
    b: (num_classes,) float32
    returns: (B, num_classes) float32
    """
    B, F = x.shape
    F2, C = w.shape
    assert F == F2
    b2d = b.reshape(1, C)  # metadata-only reshape; bias broadcasts in-kernel

    # Honest cost estimate from the logical (unpadded) shapes.
    cost = pl.CostEstimate(
        flops=2 * B * F * C,
        transcendentals=0,
        bytes_accessed=4 * (B * F + F * C + B * C + C),
    )
    out_shape = jax.ShapeDtypeStruct((B, C), x.dtype)

    if B <= block_b:
        # Single block: no grid, no pipeline bookkeeping.  Blocks equal the
        # full array extents, so the (8,128) constraint does not apply and no
        # padding is needed anywhere.
        return pl.pallas_call(
            linear_kernel,
            out_shape=out_shape,
            cost_estimate=cost,
        )(x, w, b2d)

    # ---- Gridded path: tile over batch only --------------------------------
    # Choose the number of steps first, round it up to an even count so the
    # two v7x TensorCores get balanced work, then derive the tile size (a
    # multiple of 8 for the sublane dim).  The last block may be partial:
    # Pallas masks the out-of-bounds writeback and rows are independent, so
    # the garbage rows in the final x block never affect valid output rows.
    n_steps = pl.cdiv(B, block_b)
    if n_steps > 1 and n_steps % 2 == 1:
        n_steps += 1
    tb = _round_up(pl.cdiv(B, n_steps), 8)
    grid = (pl.cdiv(B, tb),)

    # VMEM footprint per step (double-buffered): x tile tb*F*4 + out tile
    # tb*C*4 + resident W/b — with F=32, C=8 and tb=4096 this is ~1.3 MiB,
    # far inside even v5e's 16 MiB scoped-VMEM default, so no vmem_limit bump.
    return pl.pallas_call(
        linear_kernel,
        out_shape=out_shape,
        grid=grid,
        in_specs=[
            pl.BlockSpec((tb, F), lambda i: (i, 0)),   # stream x over batch
            pl.BlockSpec((F, C), lambda i: (0, 0)),    # resident weight
            pl.BlockSpec((1, C), lambda i: (0, 0)),    # resident bias row
        ],
        out_specs=pl.BlockSpec((tb, C), lambda i: (i, 0)),
        compiler_params=pltpu.CompilerParams(
            dimension_semantics=("parallel",),  # shard batch across TCs (v7x)
        ),
        cost_estimate=cost,
    )(x, w, b2d)


if __name__ == "__main__":
    # Small shapes consistent with the module: feature_dim=32, num_classes=8.
    batch, feature_dim, num_classes = 2, 32, 8

    key = jax.random.PRNGKey(0)
    kx, kw, kb = jax.random.split(key, 3)

    # Deterministic parameter init (mimics nn.Linear's uniform(-1/sqrt(F), 1/sqrt(F))).
    bound = 1.0 / (feature_dim ** 0.5)
    # PyTorch stores weight as (num_classes, feature_dim); keep it transposed
    # (done once at parameter-setup time, not per forward call).
    w_t = jax.random.uniform(kw, (feature_dim, num_classes),
                             minval=-bound, maxval=bound, dtype=jnp.float32)
    b = jax.random.uniform(kb, (num_classes,),
                           minval=-bound, maxval=bound, dtype=jnp.float32)

    x = jax.random.normal(kx, (batch, feature_dim), dtype=jnp.float32)

    out = jax.block_until_ready(office_home_dg_classifier(x, w_t, b))
    ref = x @ w_t + b
    assert out.shape == (batch, num_classes)
    assert jnp.allclose(out, ref, atol=1e-5, rtol=1e-5)

    # Also exercise the tiled (gridded) path, including a partial last block
    # (B not a multiple of the tile size).
    big_B = 1000
    xb = jax.random.normal(kx, (big_B, feature_dim), dtype=jnp.float32)
    out_b = jax.block_until_ready(
        office_home_dg_classifier(xb, w_t, b, block_b=256))
    ref_b = xb @ w_t + b
    assert out_b.shape == (big_B, num_classes)
    assert jnp.allclose(out_b, ref_b, atol=1e-5, rtol=1e-5)

    print("KERNEL_OK")
</pallas_src>

<mosaic_0001>
module attributes {stable_mosaic.version = 11 : i64} {
  func.func @linear_kernel(%arg0: memref<2x32xf32, #tpu.memory_space<vmem>>, %arg1: memref<32x8xf32, #tpu.memory_space<vmem>>, %arg2: memref<1x8xf32, #tpu.memory_space<vmem>>, %arg3: memref<2x8xf32, #tpu.memory_space<vmem>>) attributes {dimension_semantics = [], scalar_prefetch = 0 : i64, scratch_operands = 0 : i64, tpu.core_type = #tpu.core_type<tc>} {
    %c0 = arith.constant 0 : index
    %c0_0 = arith.constant 0 : index
    %0 = vector.load %arg0[%c0, %c0_0] : memref<2x32xf32, #tpu.memory_space<vmem>>, vector<2x32xf32>
    %c0_1 = arith.constant 0 : index
    %c0_2 = arith.constant 0 : index
    %1 = vector.load %arg1[%c0_1, %c0_2] : memref<32x8xf32, #tpu.memory_space<vmem>>, vector<32x8xf32>
    %cst = arith.constant dense<0.000000e+00> : vector<2x8xf32>
    %2 = tpu.matmul %0, %1, %cst {dimension_numbers = #tpu.dot_dimension_numbers<[1], [0], [0], [1], [0, 0, 1, 1], [], []>} : vector<2x32xf32>, vector<32x8xf32>, vector<2x8xf32> -> vector<2x8xf32>
    %c0_3 = arith.constant 0 : index
    %c0_4 = arith.constant 0 : index
    %3 = vector.load %arg2[%c0_3, %c0_4] : memref<1x8xf32, #tpu.memory_space<vmem>>, vector<1x8xf32>
    %4 = vector.broadcast %3 : vector<1x8xf32> to vector<2x8xf32>
    %5 = arith.addf %2, %4 : vector<2x8xf32>
    %c0_5 = arith.constant 0 : index
    %c0_6 = arith.constant 0 : index
    %6 = vector.load %arg3[%c0_5, %c0_6] : memref<2x8xf32, #tpu.memory_space<vmem>>, vector<2x8xf32>
    tpu.vector_store %arg3[%c0_5, %c0_6], %5 {strides = array<i32>} : memref<2x8xf32, #tpu.memory_space<vmem>>, vector<2x8xf32>,
    return
  }
}

</mosaic_0001>

<llo_original>
// kernel: tpu_custom_call.1
$region0: #{tpu_custom_call.1}
  #allocation0 [shape = 'u32[]', space=smem, size = 0x4, offset = 0x4, fixed_abs, tag = 'smem constant byte address 0x4 - core index']
  #allocation1 [shape = 'u32[72,128]{1,0:T(1,128)}', space=vmem, size = 0x9000, scoped, tag = 'internal scratch']
  %s0 = inlined_call_operand.vmem [shape: f32[2,32], index: 0, kind: input, shape index: {}]
  %s1 = inlined_call_operand.vmem [shape: f32[32,8], index: 1, kind: input, shape index: {}]
  %s2 = inlined_call_operand.vmem [shape: f32[1,8], index: 2, kind: input, shape index: {}]
  %s3 = inlined_call_operand.hbm [shape: f32[2,8], index: 3, kind: output, shape index: {}]
  %s4 = sld [smem:[#allocation0]]
  $region22: #{tpu_custom_call.1} parent=0
    _
  %s6 = ssub.s32 1, %s4
  %s7 = scalar_select 0, %s6, %s4
  $region1: #{tpu_custom_call.1} parent=0
    #allocation2 [shape = 'u8[1024]{0}', space=vmem, size = 0x400, scoped, tag = 'output window, operand 0, single buffered']
    #allocation3 [shape = 's32[1]{0}', space=sflag, size = 0x4, scoped, tag = 'scoped memory for tpu_custom_call.1']
    %8 = vsyncpa [#allocation3], 0
    // Predicated region
    $region2: #{tpu_custom_call.1} parent=1 // pred_check
      _
    $region3: #{tpu_custom_call.1} parent=1 // pred_check_branch
      %10 = sbr.rel (0) target = $region5
    $region4: #{tpu_custom_call.1} parent=1 // pred_region
      _
    $region5: #{tpu_custom_call.1} parent=1 // pred_fallthru
      _
    // Predicated region
    $region6: #{tpu_custom_call.1} parent=1 // pred_check
      _
    $region7: #{tpu_custom_call.1} parent=1 // pred_check_branch
      %12 = sbr.rel (0) target = $region9
    $region8: #{tpu_custom_call.1} parent=1 // pred_region
      _
    $region9: #{tpu_custom_call.1} parent=1 // pred_fallthru
      _
    // Predicated region
    $region10: #{tpu_custom_call.1} parent=1 // pred_check
      _
    $region11: #{tpu_custom_call.1} parent=1 // pred_check_branch
      %14 = sbr.rel (0) target = $region13
    $region12: #{tpu_custom_call.1} parent=1 // pred_region
      _
    $region13: #{tpu_custom_call.1} parent=1 // pred_fallthru
      _
    %v15 = vld [vmem:[%s0] sm:$0x3]
    %v16 = vld [vmem:[%s1] sm:$0xff]
    %v17 = vld [vmem:[%s1 + $0x8] sm:$0xff]
    %v18 = vld [vmem:[%s1 + $0x10] sm:$0xff]
    %v19 = vld [vmem:[%s1 + $0x18] sm:$0xff]
    %v20 = vld [vmem:[%s2] sm:$0x1]
    %v22 = vperm.slane %v20, 0
    %vm24 = vcmask 261120
    %v26 = vsel %vm24, %v15, 0
    %28 = vmatpush.msra.mxu0 0.0
    %29 = vmatpush.msra.mxu0 0.0
    %30 = vmatpush.msra.mxu0 0.0
    %31 = vmatpush.msra.mxu0 0.0
    %32 = vmatpush.msra.mxu0 0.0
    %33 = vmatpush.msra.mxu0 0.0
    %34 = vmatpush.msra.mxu0 0.0
    %35 = vmatpush.msra.mxu0 0.0
    %36 = vmatpush.msra.mxu0 0.0
    %37 = vmatpush.msra.mxu0 0.0
    %38 = vmatpush.msra.mxu0 0.0
    %39 = vmatpush.msra.mxu0 0.0
    %40 = vmatpush.msra.mxu0 %v19
    %41 = vmatpush.msra.mxu0 %v18
    %42 = vmatpush.msra.mxu0 %v17
    %43 = vmatpush.msra.mxu0 %v16
    %44 = vmatmul.f32.gmra.mxu0 %v26
    %v45 = vpop.f32.mrf.mxu0
    %v46 = vadd.f32 %v22, %v45
    %47 = vdwg.mxu0
    %vm48 = vcmask 58368
    %49 = vst.msk [vmem:[#allocation2] sm:$0x3] %vm48, %v46
    // Predicated region
    $region14: #{tpu_custom_call.1} parent=1 // pred_check
      _
    $region15: #{tpu_custom_call.1} parent=1 // pred_check_branch
      %51 = sbr.rel (0) target = $region17
    $region16: #{tpu_custom_call.1} parent=1 // pred_region
      %53 = vsyncadd [#allocation3], 0
      %s55 = sshll.u32 [#allocation2], 4
      %s56 = int_to_ptr.vmem [resolvable:$true] %s55
      %s57 = sshll.u32 %s3, 4
      %s58 = int_to_ptr.hbm [resolvable:$true] %s57
      %60 = dma.vmem_to_hbm [thread:$0]  %s56, 32, %s58, [#allocation3]
    $region17: #{tpu_custom_call.1} parent=1 // pred_fallthru
      _
    // Predicated region
    $region18: #{tpu_custom_call.1} parent=1 // pred_check
      _
    $region19: #{tpu_custom_call.1} parent=1 // pred_check_branch
      %62 = sbr.rel (0) target = $region21
    $region20: #{tpu_custom_call.1} parent=1 // pred_region
      %64 = dma.done [#allocation3], 32
    $region21: #{tpu_custom_call.1} parent=1 // pred_fallthru
      _
    %65 = vsyncpa [#allocation3], 1

</llo_original>
